<compile_context>
chip_gen: v7x
topology: tpu7x:2x2x1
jax: 0.10.0
libtpu: 0.0.40
codegen_flags: <defaults>
</compile_context>

<pallas_src>
import functools

import jax
import jax.numpy as jnp
from jax.experimental import pallas as pl
from jax.experimental.pallas import tpu as pltpu

_HALO = 128  # lane-axis halo slab width (minimum lane tile)


def _vmem_capacity_bytes():
    try:
        return int(pltpu.get_tpu_info().vmem_capacity_bytes)
    except Exception:
        return 64 * 1024 * 1024  # conservative default (v7x per-core VMEM)


def _step_vmem_bytes(C, TL, multi_tile, fused, itemsize):
    """Rough per-grid-step VMEM footprint: double-buffered I/O + weights + f32 intermediates."""
    in_blk = C * TL * itemsize
    halo = (2 * C * _HALO * itemsize) if multi_tile else 0
    out_blk = 2 * C * TL * itemsize
    w_bytes = (6 if fused else 4) * C * C * itemsize + 2 * C * 4
    interm = 6 * C * TL * 4  # x_prev/x_next/xcat/even/odd intermediates (conservative)
    return 2 * (in_blk + halo + out_blk) + 2 * w_bytes + interm


def _pick_tile_l(L, C, fused, itemsize, budget):
    """Largest L-tile dividing L whose footprint fits the generation-aware VMEM budget."""
    cands = [L] + [t for t in (2048, 1024, 512, 256, 128) if t < L and L % t == 0]
    cands = sorted(set(cands), reverse=True)
    for t in cands:
        if _step_vmem_bytes(C, t, t < L, fused, itemsize) <= budget:
            return t
    return cands[-1]


def _upsample1d_kernel(*refs, fused, with_halo):
    if with_halo:
        x_ref, xp_ref, xn_ref, w_ref, b_ref, even_ref, odd_ref = refs
    else:
        x_ref, w_ref, b_ref, even_ref, odd_ref = refs

    x_cur = x_ref[0]                       # (C, TL), native NCL orientation
    C, TL = x_cur.shape
    zero_col = jnp.zeros((C, 1), x_cur.dtype)

    if with_halo:
        j = pl.program_id(1)
        prev_col = jnp.where(j > 0, xp_ref[0, :, _HALO - 1:_HALO], zero_col)
        next_col = jnp.where(j < pl.num_programs(1) - 1, xn_ref[0, :, 0:1], zero_col)
    else:
        prev_col = zero_col
        next_col = zero_col

    # Shifted taps via XLU rotations + single-column boundary fix-up (no misaligned stores).
    lane = jax.lax.broadcasted_iota(jnp.int32, (C, TL), 1)
    x_prev = jnp.where(lane == 0, prev_col, pltpu.roll(x_cur, 1, axis=1))
    x_next = jnp.where(lane == TL - 1, next_col, pltpu.roll(x_cur, TL - 1, axis=1))

    if fused:
        # One MXU matmul: (2C, 3C) @ (3C, TL); rows 0:C = even, rows C:2C = odd.
        xcat = jnp.concatenate([x_prev, x_cur, x_next], axis=0)       # (3C, TL)
        acc = jnp.dot(w_ref[...], xcat, preferred_element_type=jnp.float32) + b_ref[...]
        even_ref[0] = acc[0:C].astype(even_ref.dtype)
        odd_ref[0] = acc[C:2 * C].astype(odd_ref.dtype)
    else:
        # Large-C path: four (C, C) @ (C, TL) matmuls (already fill the MXU; no zero-block waste).
        bias = b_ref[...]
        even = (jnp.dot(w_ref[1], x_cur, preferred_element_type=jnp.float32)
                + jnp.dot(w_ref[3], x_prev, preferred_element_type=jnp.float32) + bias)
        odd = (jnp.dot(w_ref[2], x_cur, preferred_element_type=jnp.float32)
               + jnp.dot(w_ref[0], x_next, preferred_element_type=jnp.float32) + bias)
        even_ref[0] = even.astype(even_ref.dtype)
        odd_ref[0] = odd.astype(odd_ref.dtype)


def upsample1d(x, w, b, *, tile_l=None, fuse_taps=None):
    """ConvTranspose1d(dim, dim, 4, stride=2, padding=1) forward.

    x: (B, C, L) NCL.  w: (C_in, C_out, 4) PyTorch ConvTranspose1d weight.  b: (C_out,).
    Returns (B, C, 2L) in NCL.
    """
    B, C, L = x.shape
    assert w.shape == (C, C, 4) and b.shape == (C,)

    capacity = _vmem_capacity_bytes()
    budget = max(32 * 2**20, int(0.7 * capacity))          # ~45 MiB on v7x, ~90 MiB on v5e/v6e
    if fuse_taps is None:
        fuse_taps = C <= 256                                # per-tap matmuls under-fill 256-wide MXU
    itemsize = x.dtype.itemsize

    TL = tile_l if tile_l is not None else _pick_tile_l(L, C, fuse_taps, itemsize, budget)
    assert L % TL == 0, (L, TL)
    nT = L // TL
    multi_tile = nT > 1
    if multi_tile:
        assert TL % _HALO == 0, ("multi-tile path requires tile_l % 128 == 0", TL)

    # Pre-transposed taps: Wk^T[co, ci] = w[ci, co, k]  (tiny one-time cost).
    wT = jnp.transpose(w, (1, 0, 2)).astype(x.dtype)
    w0t, w1t, w2t, w3t = (wT[:, :, k] for k in range(4))
    if fuse_taps:
        z = jnp.zeros((C, C), wT.dtype)
        w_kernel = jnp.concatenate(
            [jnp.concatenate([w3t, w1t, z], axis=1),
             jnp.concatenate([z, w2t, w0t], axis=1)], axis=0)         # (2C, 3C)
        b_kernel = jnp.concatenate([b, b]).astype(jnp.float32).reshape(2 * C, 1)
        flops = 2 * B * L * (3 * C) * (2 * C)
    else:
        w_kernel = jnp.stack([w0t, w1t, w2t, w3t], axis=0)            # (4, C, C)
        b_kernel = b.astype(jnp.float32).reshape(C, 1)
        flops = 2 * B * L * 4 * C * C

    x_spec = pl.BlockSpec((1, C, TL), lambda bi, j: (bi, 0, j))
    if w_kernel.ndim == 3:
        w_spec = pl.BlockSpec(w_kernel.shape, lambda bi, j: (0, 0, 0))
    else:
        w_spec = pl.BlockSpec(w_kernel.shape, lambda bi, j: (0, 0))
    b_spec = pl.BlockSpec(b_kernel.shape, lambda bi, j: (0, 0))
    out_spec = pl.BlockSpec((1, C, TL), lambda bi, j: (bi, 0, j))

    if multi_tile:
        hpb = TL // _HALO
        n_hb = L // _HALO
        prev_spec = pl.BlockSpec(
            (1, C, _HALO), lambda bi, j: (bi, 0, jnp.maximum(j * hpb - 1, 0)))
        next_spec = pl.BlockSpec(
            (1, C, _HALO), lambda bi, j: (bi, 0, jnp.minimum((j + 1) * hpb, n_hb - 1)))
        in_specs = [x_spec, prev_spec, next_spec, w_spec, b_spec]
        operands = (x, x, x, w_kernel, b_kernel)
    else:
        in_specs = [x_spec, w_spec, b_spec]
        operands = (x, w_kernel, b_kernel)

    step_bytes = _step_vmem_bytes(C, TL, multi_tile, fuse_taps, itemsize)
    vmem_limit = int(min(capacity, max(48 * 2**20, step_bytes + 24 * 2**20)))
    bytes_accessed = int((x.size + 2 * B * C * L) * itemsize
                         + w_kernel.size * w_kernel.dtype.itemsize + b_kernel.size * 4)

    kernel = functools.partial(_upsample1d_kernel, fused=fuse_taps, with_halo=multi_tile)

    even, odd = pl.pallas_call(
        kernel,
        out_shape=(jax.ShapeDtypeStruct((B, C, L), x.dtype),
                   jax.ShapeDtypeStruct((B, C, L), x.dtype)),
        grid_spec=pltpu.PrefetchScalarGridSpec(
            num_scalar_prefetch=0,
            grid=(B, nT),
            in_specs=in_specs,
            out_specs=[out_spec, out_spec],
        ),
        compiler_params=pltpu.CompilerParams(
            dimension_semantics=("parallel", "parallel"),
            vmem_limit_bytes=vmem_limit),
        cost_estimate=pl.CostEstimate(
            flops=flops, transcendentals=0, bytes_accessed=bytes_accessed),
    )(*operands)

    # even[..., t] -> out[..., 2t]; odd[..., t] -> out[..., 2t+1]: one fused XLA interleave pass.
    # TODO(synk): fusing this interleave into the kernel (writing (B, C, 2L) directly) would cut
    # HBM traffic further, but needs a lane-interleave relayout Mosaic does not reliably support.
    return jnp.stack([even, odd], axis=-1).reshape(B, C, 2 * L)


def ref_conv_transpose1d(x, w, b):
    """Independent reference (scatter-per-tap formulation) for ConvTranspose1d(C, C, 4, 2, 1)."""
    B, C, L = x.shape
    y = jnp.einsum('bil,iok->bokl', x.astype(jnp.float32), w.astype(jnp.float32))
    out = jnp.zeros((B, C, 2 * L), jnp.float32)
    out = out.at[:, :, 0::2].add(y[:, :, 1, :])             # k=1 -> o = 2t
    out = out.at[:, :, 1::2].add(y[:, :, 2, :])             # k=2 -> o = 2t+1
    out = out.at[:, :, 1:2 * L - 2:2].add(y[:, :, 0, 1:])   # k=0 -> o = 2t-1
    out = out.at[:, :, 2::2].add(y[:, :, 3, :L - 1])        # k=3 -> o = 2t+2
    return out + b.astype(jnp.float32)[None, :, None]


if __name__ == "__main__":
    key = jax.random.PRNGKey(0)
    k1, k2, k3, k4 = jax.random.split(key, 4)

    B, dim = 2, 8
    # nn.ConvTranspose1d(dim, dim, 4) parameters: weight (in, out, k), bias (out,)
    w = 0.1 * jax.random.normal(k2, (dim, dim, 4), dtype=jnp.float32)
    b = 0.1 * jax.random.normal(k3, (dim,), dtype=jnp.float32)

    cases = [
        # (a) small single-tile case (typical usage), default config: no halo operands at all
        (jax.random.normal(k1, (B, dim, 32), dtype=jnp.float32), [dict()]),
        # (b) longer sequence: default (single tile), multi-tile halo path, and unfused-tap path
        (jax.random.normal(k4, (B, dim, 256), dtype=jnp.float32),
         [dict(), dict(tile_l=128), dict(tile_l=128, fuse_taps=False)]),
    ]

    for x, cfgs in cases:
        expected = ref_conv_transpose1d(x, w, b)
        for cfg in cfgs:
            out = jax.block_until_ready(upsample1d(x, w, b, **cfg))
            assert out.shape == (x.shape[0], dim, 2 * x.shape[2]), (cfg, out.shape)
            err = float(jnp.max(jnp.abs(out - expected)))
            assert jnp.allclose(out, expected, atol=1e-4, rtol=1e-4), (cfg, err)

    print("KERNEL_OK")
</pallas_src>

<mosaic_0001>
module attributes {stable_mosaic.version = 11 : i64} {
  func.func @_upsample1d_kernel(%arg0: i32, %arg1: i32, %arg2: memref<1x8x32xf32, #tpu.memory_space<vmem>>, %arg3: memref<16x24xf32, #tpu.memory_space<vmem>>, %arg4: memref<16x1xf32, #tpu.memory_space<vmem>>, %arg5: memref<1x8x32xf32, #tpu.memory_space<vmem>>, %arg6: memref<1x8x32xf32, #tpu.memory_space<vmem>>) attributes {dimension_semantics = [#tpu.dimension_semantics<parallel>, #tpu.dimension_semantics<parallel>], iteration_bounds = array<i64: 2, 1>, scalar_prefetch = 0 : i64, scratch_operands = 0 : i64, tpu.core_type = #tpu.core_type<tc>, window_params = [{transform_indices = @transform_0, window_bounds = array<i64: 1, 8, 32>}, {pipeline_mode = #tpu.pipeline_mode<synchronous>, transform_indices = @transform_1, window_bounds = array<i64: 16, 24>}, {pipeline_mode = #tpu.pipeline_mode<synchronous>, transform_indices = @transform_2, window_bounds = array<i64: 16, 1>}, {transform_indices = @transform_3, window_bounds = array<i64: 1, 8, 32>}, {transform_indices = @transform_4, window_bounds = array<i64: 1, 8, 32>}]} {
    %c0 = arith.constant 0 : index
    %c0_0 = arith.constant 0 : index
    %c0_1 = arith.constant 0 : index
    %0 = vector.load %arg2[%c0, %c0_0, %c0_1] : memref<1x8x32xf32, #tpu.memory_space<vmem>>, vector<1x8x32xf32>
    %1 = vector.shape_cast %0 : vector<1x8x32xf32> to vector<8x32xf32>
    %cst = arith.constant 0.000000e+00 : f32
    %2 = vector.broadcast %cst : f32 to vector<8x1xf32>
    %3 = tpu.iota {dimensions = array<i32: 1>} : vector<8x32xi32>
    %c0_i32 = arith.constant 0 : i32
    %4 = vector.broadcast %c0_i32 : i32 to vector<8x32xi32>
    %5 = arith.cmpi eq, %3, %4 : vector<8x32xi32>
    %c1_i32 = arith.constant 1 : i32
    %6 = tpu.dynamic_rotate %1 by %c1_i32 dim 1 : vector<8x32xf32>, i32 -> vector<8x32xf32>
    %7 = vector.shape_cast %2 : vector<8x1xf32> to vector<8x1xf32>
    %8 = vector.broadcast %7 : vector<8x1xf32> to vector<8x32xf32>
    %9 = arith.select %5, %8, %6 : vector<8x32xi1>, vector<8x32xf32>
    %c31_i32 = arith.constant 31 : i32
    %10 = vector.broadcast %c31_i32 : i32 to vector<8x32xi32>
    %11 = arith.cmpi eq, %3, %10 : vector<8x32xi32>
    %c31_i32_2 = arith.constant 31 : i32
    %12 = tpu.dynamic_rotate %1 by %c31_i32_2 dim 1 : vector<8x32xf32>, i32 -> vector<8x32xf32>
    %13 = vector.shape_cast %2 : vector<8x1xf32> to vector<8x1xf32>
    %14 = vector.broadcast %13 : vector<8x1xf32> to vector<8x32xf32>
    %15 = arith.select %11, %14, %12 : vector<8x32xi1>, vector<8x32xf32>
    %16 = tpu.concatenate %9, %1, %15 in 0 : vector<8x32xf32>, vector<8x32xf32>, vector<8x32xf32> -> vector<24x32xf32>
    %c0_3 = arith.constant 0 : index
    %c0_4 = arith.constant 0 : index
    %17 = vector.load %arg3[%c0_3, %c0_4] : memref<16x24xf32, #tpu.memory_space<vmem>>, vector<16x24xf32>
    %cst_5 = arith.constant dense<0.000000e+00> : vector<16x32xf32>
    %18 = tpu.matmul %17, %16, %cst_5 {dimension_numbers = #tpu.dot_dimension_numbers<[1], [0], [0], [1], [0, 0, 1, 1], [], []>} : vector<16x24xf32>, vector<24x32xf32>, vector<16x32xf32> -> vector<16x32xf32>
    %c0_6 = arith.constant 0 : index
    %c0_7 = arith.constant 0 : index
    %19 = vector.load %arg4[%c0_6, %c0_7] : memref<16x1xf32, #tpu.memory_space<vmem>>, vector<16x1xf32>
    %20 = vector.broadcast %19 : vector<16x1xf32> to vector<16x32xf32>
    %21 = arith.addf %18, %20 : vector<16x32xf32>
    %22 = vector.extract_strided_slice %21 {offsets = [0, 0], sizes = [8, 32], strides = [1, 1]} : vector<16x32xf32> to vector<8x32xf32>
    %c0_8 = arith.constant 0 : index
    %c0_9 = arith.constant 0 : index
    %c0_10 = arith.constant 0 : index
    %23 = vector.load %arg5[%c0_8, %c0_9, %c0_10] : memref<1x8x32xf32, #tpu.memory_space<vmem>>, vector<1x8x32xf32>
    %24 = vector.shape_cast %23 : vector<1x8x32xf32> to vector<8x32xf32>
    %25 = vector.shape_cast %22 : vector<8x32xf32> to vector<1x8x32xf32>
    tpu.vector_store %arg5[%c0_8, %c0_9, %c0_10], %25 {strides = array<i32>} : memref<1x8x32xf32, #tpu.memory_space<vmem>>, vector<1x8x32xf32>,
    %26 = vector.extract_strided_slice %21 {offsets = [8, 0], sizes = [8, 32], strides = [1, 1]} : vector<16x32xf32> to vector<8x32xf32>
    %c0_11 = arith.constant 0 : index
    %c0_12 = arith.constant 0 : index
    %c0_13 = arith.constant 0 : index
    %27 = vector.load %arg6[%c0_11, %c0_12, %c0_13] : memref<1x8x32xf32, #tpu.memory_space<vmem>>, vector<1x8x32xf32>
    %28 = vector.shape_cast %27 : vector<1x8x32xf32> to vector<8x32xf32>
    %29 = vector.shape_cast %26 : vector<8x32xf32> to vector<1x8x32xf32>
    tpu.vector_store %arg6[%c0_11, %c0_12, %c0_13], %29 {strides = array<i32>} : memref<1x8x32xf32, #tpu.memory_space<vmem>>, vector<1x8x32xf32>,
    return
  }
  func.func @transform_0(%arg0: i32, %arg1: i32) -> (i32, i32, i32) {
    %c0_i32 = arith.constant 0 : i32
    %c0_i32_0 = arith.constant 0 : i32
    return %arg0, %c0_i32, %arg1 : i32, i32, i32
  }
  func.func @transform_1(%arg0: i32, %arg1: i32) -> (i32, i32) {
    %c0_i32 = arith.constant 0 : i32
    %c0_i32_0 = arith.constant 0 : i32
    %c0_i32_1 = arith.constant 0 : i32
    return %c0_i32, %c0_i32_0 : i32, i32
  }
  func.func @transform_2(%arg0: i32, %arg1: i32) -> (i32, i32) {
    %c0_i32 = arith.constant 0 : i32
    %c0_i32_0 = arith.constant 0 : i32
    %c0_i32_1 = arith.constant 0 : i32
    return %c0_i32, %c0_i32_0 : i32, i32
  }
  func.func @transform_3(%arg0: i32, %arg1: i32) -> (i32, i32, i32) {
    %c0_i32 = arith.constant 0 : i32
    %c0_i32_0 = arith.constant 0 : i32
    return %arg0, %c0_i32, %arg1 : i32, i32, i32
  }
  func.func @transform_4(%arg0: i32, %arg1: i32) -> (i32, i32, i32) {
    %c0_i32 = arith.constant 0 : i32
    %c0_i32_0 = arith.constant 0 : i32
    return %arg0, %c0_i32, %arg1 : i32, i32, i32
  }
}

</mosaic_0001>

<llo_original>
// kernel: tpu_custom_call.1
$region0: #{tpu_custom_call.1}
  #allocation0 [shape = 'u32[]', space=smem, size = 0x4, offset = 0x4, fixed_abs, tag = 'smem constant byte address 0x4 - core index']
  #allocation1 [shape = 'u32[144,128]{1,0:T(1,128)}', space=vmem, size = 0x12000, scoped, tag = 'internal scratch']
  %s0 = inlined_call_operand.vmem [shape: f32[2,8,32], index: 0, kind: input, shape index: {}]
  %s1 = inlined_call_operand.hbm [shape: f32[16,24], index: 1, kind: input, shape index: {}]
  %s2 = inlined_call_operand.vmem [shape: f32[16,1], index: 2, kind: input, shape index: {}]
  %s3 = inlined_call_operand.hbm [shape: f32[2,8,32], index: 3, kind: output, shape index: {0}]
  %s4 = inlined_call_operand.hbm [shape: f32[2,8,32], index: 4, kind: output, shape index: {1}]
  %5 = xla_tuple %s3, %s4
  %s6 = sld [smem:[#allocation0]]
  $region57: #{tpu_custom_call.1} parent=0
    _
  %s8 = ssub.s32 1, %s6
  %s9 = scalar_select 0, %s8, %s6
  $region1: #{tpu_custom_call.1} parent=0
    #allocation2 [shape = 'u8[8192]{0}', space=vmem, size = 0x2000, scoped, tag = 'input window, operand 1, single buffered']
    #allocation3 [shape = 's32[2]{0}', space=sflag, size = 0x8, scoped, tag = 'scoped memory for tpu_custom_call.1']
    #allocation4 [shape = 's32[2]{0}', space=sflag, size = 0x8, scoped, tag = 'scoped memory for tpu_custom_call.1']
    #allocation5 [shape = 'u8[8192]{0}', space=vmem, size = 0x2000, scoped, tag = 'output window, operand 0']
    #allocation6 [shape = 'u8[8192]{0}', space=vmem, size = 0x2000, scoped, tag = 'output window, operand 1']
    #allocation7 [shape = 's32[2]{0}', space=sflag, size = 0x8, scoped, tag = 'scoped memory for tpu_custom_call.1']
    %10 = vsyncpa [#allocation3], 0
    %11 = vsyncpa [#allocation4], 0
    %s12 = scalar_lea.sflag [#allocation4], 1
    %13 = vsyncpa %s12, 0
    %14 = vsyncpa [#allocation7], 0
    %s15 = scalar_lea.sflag [#allocation7], 1
    %16 = vsyncpa %s15, 0
    loop: start=0, step=1, limit=4
    $region2: #{tpu_custom_call.1} parent=1 // loop_pre_header
      _
    $region3: #{tpu_custom_call.1} parent=1 // loop_header
      %s18 = sphi 0, %s22
      %p19 = scmp.ge.s32.totalorder %s18, 4
      %s25 = sphi 0, %s37
      %s26 = sphi 0, %s33
      %s27 = sphi 0, %s25
      %s28 = sphi 0, %s26
      %s29 = sphi 0, %s27
      %s30 = sphi 0, %s28
      %s42 = sphi 0, %s44
      %s45 = sphi 0, %s42
      %s46 = sphi 0, %s45
      %s62 = sphi 0, %s46
      %s66 = sphi 0, %s66
      %s68 = sphi 0, %s66
      %s69 = sphi 0, %s68
      %s83 = sphi 0, %s69
      %s87 = sphi 0, %s87
      %s89 = sphi 0, %s87
      %s90 = sphi 0, %s89
      %s104 = sphi 0, %s90
      %s112 = sphi 0, %s114
      %s115 = sphi 0, %s112
      %s116 = sphi 0, %s115
      %s132 = sphi 0, %s116
      %s140 = sphi 0, %s142
      %s143 = sphi 0, %s140
      %s144 = sphi 0, %s143
      %s160 = sphi 0, %s144
    $region4: #{tpu_custom_call.1} parent=1 // loop_header_branch
      %21 = sbr.rel (%p19) target = $region8
    $region5: #{tpu_custom_call.1} parent=1 // loop_body
      %s23 = ssub.s32 %s18, 1
      %s24 = ssub.s32 %s18, 2
      %s31 = sadd.s32 1, %s26
      %p32 = scmp.ge.s32.totalorder %s31, 1
      %s33 = scalar_select %p32, 0, %s31
      %s34 = sadd.s32 1, %s25
      %s35 = scalar_select %p32, %s34, %s25
      %p36 = scmp.ge.s32.totalorder %s35, 2
      %s37 = scalar_select %p36, 0, %s35
      %s38 = ssub.s32 %s25, %s37
      %s39 = ssub.s32 %s26, %s33
      %s40 = sor.u32 %s38, %s39
      %p41 = scmp.eq.s32.totalorder %s40, 0
      %s43 = sadd.s32 %s42, 1
      %s44 = scalar_select %p41, %s42, %s43
      %p47 = pneg %p41
      %p48 = scmp.eq.s32.totalorder %s18, 1
      %p49 = por %p47, %p48
      %p50 = scmp.ne.s32.totalorder %s42, %s45
      %p51 = scmp.eq.s32.totalorder %s18, 0
      %p52 = por %p50, %p51
      %p53 = scmp.ne.s32.totalorder %s42, %s45
      %p54 = scmp.eq.s32.totalorder %s23, 1
      %p55 = por %p53, %p54
      %p56 = scmp.ne.s32.totalorder %s45, %s46
      %p57 = scmp.eq.s32.totalorder %s23, 0
      %p58 = por %p56, %p57
      %p59 = scmp.ne.s32.totalorder %s45, %s46
      %p60 = scmp.eq.s32.totalorder %s24, 1
      %p61 = por %p59, %p60
      %p63 = scmp.ne.s32.totalorder %s46, %s62
      %p64 = scmp.eq.s32.totalorder %s24, 0
      %p65 = por %p63, %p64
      %s67 = sadd.s32 %s66, 1
      %p70 = scmp.eq.s32.totalorder %s18, 1
      %p71 = scmp.ne.s32.totalorder %s66, %s68
      %p72 = scmp.eq.s32.totalorder %s18, 0
      %p73 = por %p71, %p72
      %p74 = scmp.ne.s32.totalorder %s66, %s68
      %p75 = scmp.eq.s32.totalorder %s23, 1
      %p76 = por %p74, %p75
      %p77 = scmp.ne.s32.totalorder %s68, %s69
      %p78 = scmp.eq.s32.totalorder %s23, 0
      %p79 = por %p77, %p78
      %p80 = scmp.ne.s32.totalorder %s68, %s69
      %p81 = scmp.eq.s32.totalorder %s24, 1
      %p82 = por %p80, %p81
      %p84 = scmp.ne.s32.totalorder %s69, %s83
      %p85 = scmp.eq.s32.totalorder %s24, 0
      %p86 = por %p84, %p85
      %s88 = sadd.s32 %s87, 1
      %p91 = scmp.eq.s32.totalorder %s18, 1
      %p92 = scmp.ne.s32.totalorder %s87, %s89
      %p93 = scmp.eq.s32.totalorder %s18, 0
      %p94 = por %p92, %p93
      %p95 = scmp.ne.s32.totalorder %s87, %s89
      %p96 = scmp.eq.s32.totalorder %s23, 1
      %p97 = por %p95, %p96
      %p98 = scmp.ne.s32.totalorder %s89, %s90
      %p99 = scmp.eq.s32.totalorder %s23, 0
      %p100 = por %p98, %p99
      %p101 = scmp.ne.s32.totalorder %s89, %s90
      %p102 = scmp.eq.s32.totalorder %s24, 1
      %p103 = por %p101, %p102
      %p105 = scmp.ne.s32.totalorder %s90, %s104
      %p106 = scmp.eq.s32.totalorder %s24, 0
      %p107 = por %p105, %p106
      %s108 = ssub.s32 %s25, %s37
      %s109 = ssub.s32 %s26, %s33
      %s110 = sor.u32 %s108, %s109
      %p111 = scmp.eq.s32.totalorder %s110, 0
      %s113 = sadd.s32 %s112, 1
      %s114 = scalar_select %p111, %s112, %s113
      %p117 = pneg %p111
      %p118 = scmp.eq.s32.totalorder %s18, 1
      %p119 = por %p117, %p118
      %p120 = scmp.ne.s32.totalorder %s112, %s115
      %p121 = scmp.eq.s32.totalorder %s18, 0
      %p122 = por %p120, %p121
      %p123 = scmp.ne.s32.totalorder %s112, %s115
      %p124 = scmp.eq.s32.totalorder %s23, 1
      %p125 = por %p123, %p124
      %p126 = scmp.ne.s32.totalorder %s115, %s116
      %p127 = scmp.eq.s32.totalorder %s23, 0
      %p128 = por %p126, %p127
      %p129 = scmp.ne.s32.totalorder %s115, %s116
      %p130 = scmp.eq.s32.totalorder %s24, 1
      %p131 = por %p129, %p130
      %p133 = scmp.ne.s32.totalorder %s116, %s132
      %p134 = scmp.eq.s32.totalorder %s24, 0
      %p135 = por %p133, %p134
      %s136 = ssub.s32 %s25, %s37
      %s137 = ssub.s32 %s26, %s33
      %s138 = sor.u32 %s136, %s137
      %p139 = scmp.eq.s32.totalorder %s138, 0
      %s141 = sadd.s32 %s140, 1
      %s142 = scalar_select %p139, %s140, %s141
      %p145 = pneg %p139
      %p146 = scmp.eq.s32.totalorder %s18, 1
      %p147 = por %p145, %p146
      %p148 = scmp.ne.s32.totalorder %s140, %s143
      %p149 = scmp.eq.s32.totalorder %s18, 0
      %p150 = por %p148, %p149
      %p151 = scmp.ne.s32.totalorder %s140, %s143
      %p152 = scmp.eq.s32.totalorder %s23, 1
      %p153 = por %p151, %p152
      %p154 = scmp.ne.s32.totalorder %s143, %s144
      %p155 = scmp.eq.s32.totalorder %s23, 0
      %p156 = por %p154, %p155
      %p157 = scmp.ne.s32.totalorder %s143, %s144
      %p158 = scmp.eq.s32.totalorder %s24, 1
      %p159 = por %p157, %p158
      %p161 = scmp.ne.s32.totalorder %s144, %s160
      %p162 = scmp.eq.s32.totalorder %s24, 0
      %p163 = por %p161, %p162
      %p164 = scmp.le.s32.totalorder 1, %s18
      %p165 = scmp.lt.s32.totalorder %s18, 3
      %p166 = pnand %p164, %p165
      %p167 = pneg %p166
      // Predicated region
      $region9: #{tpu_custom_call.1} parent=5 // pred_check
        _
      $region10: #{tpu_custom_call.1} parent=5 // pred_check_branch
        %169 = sbr.rel (%p166) target = $region12
      $region11: #{tpu_custom_call.1} parent=5 // pred_region
        %s170 = ssub.s32 %s18, 1
        // Predicated region
        $region13: #{tpu_custom_call.1} parent=11 // pred_check
          %p171 = pneg %p79
        $region14: #{tpu_custom_call.1} parent=11 // pred_check_branch
          %173 = sbr.rel (%p171) target = $region16
        $region15: #{tpu_custom_call.1} parent=11 // pred_region
          %s175 = ssub.s32 256, 256
          %176 = vsyncadd [#allocation3], %s175
          %s177 = sshll.u32 [#allocation2], 4
          %s178 = int_to_ptr.vmem [resolvable:$true] %s177
          %183 = dma.hbm_to_vmem [thread:$0]  %s1, 256, %s178, [#allocation3], 128, 128, 8
        $region16: #{tpu_custom_call.1} parent=11 // pred_fallthru
          _
        // Predicated region
        $region17: #{tpu_custom_call.1} parent=11 // pred_check
          %p184 = pneg %p100
        $region18: #{tpu_custom_call.1} parent=11 // pred_check_branch
          %186 = sbr.rel (%p184) target = $region20
        $region19: #{tpu_custom_call.1} parent=11 // pred_region
          _
        $region20: #{tpu_custom_call.1} parent=11 // pred_fallthru
          _
      $region12: #{tpu_custom_call.1} parent=5 // pred_fallthru
        _
      %p187 = scmp.lt.s32.totalorder %s18, 2
      // Predicated region
      $region21: #{tpu_custom_call.1} parent=5 // pred_check
        %p188 = pneg %p187
      $region22: #{tpu_custom_call.1} parent=5 // pred_check_branch
        %190 = sbr.rel (%p188) target = $region24
      $region23: #{tpu_custom_call.1} parent=5 // pred_region
        // Predicated region
        $region25: #{tpu_custom_call.1} parent=23 // pred_check
          %p191 = pneg %p52
        $region26: #{tpu_custom_call.1} parent=23 // pred_check_branch
          %193 = sbr.rel (%p191) target = $region28
        $region27: #{tpu_custom_call.1} parent=23 // pred_region
          %p194 = scmp.lt.s32.totalorder %s25, 1
          %s195 = scalar_select %p194, %s25, 1
          %p196 = scmp.lt.s32.totalorder %s26, 0
          %s197 = scalar_select %p196, %s26, 0
          %s198 = sadd.s32 %s197, %s195
          %s199 = smul.addr %s198, 8
          %s200 = scalar_lea.vmem %s0, %s199
        $region28: #{tpu_custom_call.1} parent=23 // pred_fallthru
          _
      $region24: #{tpu_custom_call.1} parent=5 // pred_fallthru
        _
      %p201 = scmp.le.s32.totalorder 1, %s18
      %p202 = scmp.lt.s32.totalorder %s18, 3
      %p203 = pnand %p201, %p202
      %p204 = pneg %p203
      // Predicated region
      $region29: #{tpu_custom_call.1} parent=5 // pred_check
        _
      $region30: #{tpu_custom_call.1} parent=5 // pred_check_branch
        %206 = sbr.rel (%p203) target = $region32
      $region31: #{tpu_custom_call.1} parent=5 // pred_region
        %s207 = ssub.s32 %s18, 1
        // Predicated region
        $region33: #{tpu_custom_call.1} parent=31 // pred_check
          %p208 = pneg %p79
        $region34: #{tpu_custom_call.1} parent=31 // pred_check_branch
          %210 = sbr.rel (%p208) target = $region36
        $region35: #{tpu_custom_call.1} parent=31 // pred_region
          %211 = dma.done [#allocation3], 256
        $region36: #{tpu_custom_call.1} parent=31 // pred_fallthru
          _
        %p212 = scmp.lt.s32.totalorder %s27, 1
        %s213 = scalar_select %p212, %s27, 1
        %p214 = scmp.lt.s32.totalorder %s28, 0
        %s215 = scalar_select %p214, %s28, 0
        %s216 = sadd.s32 %s215, %s213
        %s217 = smul.addr %s216, 8
        %s218 = scalar_lea.vmem %s0, %s217
        %p219 = pneg %p58
        %p220 = pneg %p55
        %p221 = pneg %p79
        %p222 = pneg %p76
        %p223 = pneg %p100
        %p224 = pneg %p97
        %p225 = pneg %p128
        %p226 = pneg %p125
        %s227 = sand.u32 %s115, 1
        %s228 = scalar_lea.sflag [#allocation4], %s227
        %s229 = sand.u32 %s115, 1
        %s230 = smul.addr %s229, 8
        %s231 = scalar_lea.vmem [#allocation5], %s230
        %p232 = pneg %p156
        %p233 = pneg %p153
        %s234 = sand.u32 %s143, 1
        %s235 = scalar_lea.sflag [#allocation7], %s234
        %s236 = sand.u32 %s143, 1
        %s237 = smul.addr %s236, 8
        %s238 = scalar_lea.vmem [#allocation6], %s237
        %p239 = scmp.lt.s32.totalorder %s27, 1
        %s240 = scalar_select %p239, %s27, 1
        %p241 = scmp.lt.s32.totalorder %s28, 0
        %s242 = scalar_select %p241, %s28, 0
        %s243 = sadd.s32 %s242, %s240
        %s244 = smul.addr %s243, 8
        %s245 = scalar_lea.vmem %s0, %s244
        %v246 = vld [vmem:[%s245] sm:$0xff]
        %v247 = vlaneseq
        %v248 = vand.u32 %v247, 127
        %vm249 = vcmp.eq.s32.totalorder %v248, 0
        %vm250 = vcmask 1047808
        %251 = vrot.lane.b32.xlu0 %v246, 32
        %v252 = vpop.permute.xlu0 %251
        %v253 = vsel %vm250, %v252, %v246
        %254 = vrot.lane.b32.xlu0 %v253, 32
        %v255 = vpop.permute.xlu0 %254
        %v256 = vsel %vm250, %v255, %v246
        %258 = vrot.lane.b32.xlu0 %v256, 97
        %v259 = vpop.permute.xlu0 %258
        %v261 = vsel %vm249, 0.0, %v259
        %vm262 = vcmp.eq.s32.totalorder %v248, 31
        %263 = vrot.lane.b32.xlu0 %v256, 127
        %v264 = vpop.permute.xlu0 %263
        %v266 = vsel %vm262, 0.0, %v264
        %v267 = vld [vmem:[#allocation2] sm:$0xff]
        %v268 = vld [vmem:[#allocation2 + $0x8] sm:$0xff]
        %v269 = vld [vmem:[%s2] sm:$0xff]
        %v270 = vld [vmem:[%s2 + $0x8] sm:$0xff]
        %272 = vset.pattern.permute.xlu0 0
        %273 = vperm.xlu0 %272, %v269
        %v274 = vpop.permute.xlu0 %273
        %277 = vset.pattern.permute.xlu0 0
        %278 = vperm.xlu0 %277, %v270
        %v279 = vpop.permute.xlu0 %278
        %vm281 = vcmask 195584
        %v283 = vsel %vm281, %v267, 0
        %v286 = vsel %vm281, %v268, 0
        %288 = vmatprep.subr.mxu0 0.0
        %289 = vmatpush1.msra.mxu0 %v261
        %290 = vmatprep.subr.mxu0 0.0
        %291 = vmatpush1.msra.mxu0 %v246
        %292 = vmatprep.subr.mxu0 0.0
        %293 = vmatpush1.msra.mxu0 %v266
        %294 = vmatprep.subr.mxu0 0.0
        %295 = vmatpush1.msra.mxu0 0.0
        %296 = vmatprep.subr.mxu0 0.0
        %297 = vmatpush1.msra.mxu0 0.0
        %298 = vmatprep.subr.mxu0 0.0
        %299 = vmatpush1.msra.mxu0 0.0
        %300 = vmatprep.subr.mxu0 0.0
        %301 = vmatpush1.msra.mxu0 0.0
        %302 = vmatprep.subr.mxu0 0.0
        %303 = vmatpush1.msra.mxu0 0.0
        %304 = vmatprep.subr.mxu0 0.0
        %305 = vmatpush1.msra.mxu0 0.0
        %306 = vmatprep.subr.mxu0 0.0
        %307 = vmatpush1.msra.mxu0 0.0
        %308 = vmatprep.subr.mxu0 0.0
        %309 = vmatpush1.msra.mxu0 0.0
        %310 = vmatprep.subr.mxu0 0.0
        %311 = vmatpush1.msra.mxu0 0.0
        %312 = vmatprep.subr.mxu0 0.0
        %313 = vmatpush1.msra.mxu0 0.0
        %314 = vmatprep.subr.mxu0 0.0
        %315 = vmatpush1.msra.mxu0 0.0
        %316 = vmatprep.subr.mxu0 0.0
        %317 = vmatpush1.msra.mxu0 0.0
        %318 = vmatprep.subr.mxu0 0.0
        %319 = vmatpush1.msra.mxu0 0.0
        %320 = vmatprep.subr.mxu0 0.0
        %321 = vmatpush1.msra.mxu0 0.0
        %322 = vmatprep.subr.mxu0 0.0
        %323 = vmatpush1.msra.mxu0 0.0
        %324 = vmatprep.subr.mxu0 0.0
        %325 = vmatpush1.msra.mxu0 0.0
        %326 = vmatprep.subr.mxu0 0.0
        %327 = vmatpush1.msra.mxu0 0.0
        %328 = vmatprep.subr.mxu0 0.0
        %329 = vmatpush1.msra.mxu0 0.0
        %330 = vmatprep.subr.mxu0 0.0
        %331 = vmatpush1.msra.mxu0 0.0
        %332 = vmatprep.subr.mxu0 0.0
        %333 = vmatpush1.msra.mxu0 0.0
        %334 = vmatprep.subr.mxu0 0.0
        %335 = vmatpush1.msra.mxu0 0.0
        %336 = vmatprep.subr.mxu0 0.0
        %337 = vmatpush1.msra.mxu0 0.0
        %338 = vmatprep.subr.mxu0 0.0
        %339 = vmatpush1.msra.mxu0 0.0
        %340 = vmatprep.subr.mxu0 0.0
        %341 = vmatpush1.msra.mxu0 0.0
        %342 = vmatprep.subr.mxu0 0.0
        %343 = vmatpush1.msra.mxu0 0.0
        %344 = vmatprep.subr.mxu0 0.0
        %345 = vmatpush1.msra.mxu0 0.0
        %346 = vmatprep.subr.mxu0 0.0
        %347 = vmatpush1.msra.mxu0 0.0
        %348 = vmatprep.subr.mxu0 0.0
        %349 = vmatpush1.msra.mxu0 0.0
        %350 = vmatprep.subr.mxu0 0.0
        %351 = vmatpush1.msra.mxu0 0.0
        %352 = vmatprep.mubr.f32.mxu0 0.0
        %353 = vmatmul.mubr.f32.gmra.mrb[0].mxu0 %v283
        %v354 = vpop.f32.mrb[0].mxu0
        %v355 = vadd.f32 %v274, %v354
        %v356 = vpop.f32.mrb[0].mxu0
        %357 = vmatprep.mubr.f32.mxu0 0.0
        %358 = vmatmul.mubr.f32.gmra.mrb[0].mxu0 %v286
        %v359 = vpop.f32.mrb[0].mxu0
        %v360 = vadd.f32 %v279, %v359
        %v361 = vpop.f32.mrb[0].mxu0
        %362 = vdwg.mxu0
        %vm363 = vcmask 261120
        %364 = vst.msk [vmem:[%s231] sm:$0xff] %vm363, %v355
        %365 = vst.msk [vmem:[%s238] sm:$0xff] %vm363, %v360
        %s366 = sand.u32 %s115, 1
        %s367 = scalar_lea.sflag [#allocation4], %s366
        %s368 = sand.u32 %s115, 1
        %s369 = smul.addr %s368, 8
        %s370 = scalar_lea.vmem [#allocation5], %s369
        %s371 = sand.u32 %s143, 1
        %s372 = scalar_lea.sflag [#allocation7], %s371
        %s373 = sand.u32 %s143, 1
        %s374 = smul.addr %s373, 8
        %s375 = scalar_lea.vmem [#allocation6], %s374
        // Predicated region
        $region37: #{tpu_custom_call.1} parent=31 // pred_check
          %p376 = pneg %p125
        $region38: #{tpu_custom_call.1} parent=31 // pred_check_branch
          %378 = sbr.rel (%p376) target = $region40
        $region39: #{tpu_custom_call.1} parent=31 // pred_region
          %s380 = ssub.s32 128, 128
          %381 = vsyncadd %s367, %s380
          %s382 = sadd.s32 %s28, %s27
          %s383 = smul.addr %s382, 128
          %s384 = scalar_lea.hbm %s3, %s383
          %s386 = sshll.u32 %s370, 4
          %s387 = int_to_ptr.vmem [resolvable:$true] %s386
          %389 = dma.vmem_to_hbm [thread:$0]  %s387, 128, %s384, %s367
        $region40: #{tpu_custom_call.1} parent=31 // pred_fallthru
          _
        // Predicated region
        $region41: #{tpu_custom_call.1} parent=31 // pred_check
          %p390 = pneg %p153
        $region42: #{tpu_custom_call.1} parent=31 // pred_check_branch
          %392 = sbr.rel (%p390) target = $region44
        $region43: #{tpu_custom_call.1} parent=31 // pred_region
          %s394 = ssub.s32 128, 128
          %395 = vsyncadd %s372, %s394
          %s396 = sadd.s32 %s28, %s27
          %s397 = smul.addr %s396, 128
          %s398 = scalar_lea.hbm %s4, %s397
          %s400 = sshll.u32 %s375, 4
          %s401 = int_to_ptr.vmem [resolvable:$true] %s400
          %403 = dma.vmem_to_hbm [thread:$0]  %s401, 128, %s398, %s372
        $region44: #{tpu_custom_call.1} parent=31 // pred_fallthru
          _
      $region32: #{tpu_custom_call.1} parent=5 // pred_fallthru
        _
      %p404 = scmp.le.s32.totalorder 2, %s18
      // Predicated region
      $region45: #{tpu_custom_call.1} parent=5 // pred_check
        %p405 = pneg %p404
      $region46: #{tpu_custom_call.1} parent=5 // pred_check_branch
        %407 = sbr.rel (%p405) target = $region48
      $region47: #{tpu_custom_call.1} parent=5 // pred_region
        %s408 = ssub.s32 %s18, 2
        // Predicated region
        $region49: #{tpu_custom_call.1} parent=47 // pred_check
          %p409 = pneg %p131
        $region50: #{tpu_custom_call.1} parent=47 // pred_check_branch
          %411 = sbr.rel (%p409) target = $region52
        $region51: #{tpu_custom_call.1} parent=47 // pred_region
          %s412 = sand.u32 %s116, 1
          %s413 = scalar_lea.sflag [#allocation4], %s412
          %s414 = sand.u32 %s116, 1
          %s415 = smul.addr %s414, 8
          %s416 = scalar_lea.vmem [#allocation5], %s415
          %417 = dma.done %s413, 128
        $region52: #{tpu_custom_call.1} parent=47 // pred_fallthru
          _
        // Predicated region
        $region53: #{tpu_custom_call.1} parent=47 // pred_check
          %p418 = pneg %p159
        $region54: #{tpu_custom_call.1} parent=47 // pred_check_branch
          %420 = sbr.rel (%p418) target = $region56
        $region55: #{tpu_custom_call.1} parent=47 // pred_region
          %s421 = sand.u32 %s144, 1
          %s422 = scalar_lea.sflag [#allocation7], %s421
          %s423 = sand.u32 %s144, 1
          %s424 = smul.addr %s423, 8
          %s425 = scalar_lea.vmem [#allocation6], %s424
          %426 = dma.done %s422, 128
        $region56: #{tpu_custom_call.1} parent=47 // pred_fallthru
          _
      $region48: #{tpu_custom_call.1} parent=5 // pred_fallthru
        _
    $region6: #{tpu_custom_call.1} parent=1 // loop_footer
      %s22 = sadd.s32 1, %s18
    $region7: #{tpu_custom_call.1} parent=1 // loop_footer_branch
      %17 = sbr.rel target = $region3
    $region8: #{tpu_custom_call.1} parent=1 // loop_exit
      _
    %427 = vsyncpa [#allocation3], 1
    %s428 = scalar_lea.sflag [#allocation3], 1
    %429 = vsyncpa %s428, 1
    %430 = vsyncpa [#allocation4], 1
    %s431 = scalar_lea.sflag [#allocation4], 1
    %432 = vsyncpa %s431, 1
    %433 = vsyncpa [#allocation7], 1
    %s434 = scalar_lea.sflag [#allocation7], 1
    %435 = vsyncpa %s434, 1

</llo_original>
